<compile_context>
chip_gen: v7x
topology: tpu7x:2x2x1
jax: 0.10.0
libtpu: 0.0.40
codegen_flags: <defaults>
</compile_context>

<pallas_src>
import functools

import jax
import jax.numpy as jnp
from jax.experimental import pallas as pl
from jax.experimental.pallas import tpu as pltpu


def _select_dma_kernel(x_hbm, out_hbm, sem, *, index, d):
    # x_hbm : (B, S*D) ref left in HBM (memory_space=pl.ANY)
    # out_hbm: (B, D)  ref left in HBM (memory_space=pl.ANY)
    # One strided HBM->HBM DMA: source rows start at element index*d with row
    # stride S*D; destination is fully contiguous.  Static index -> static slice.
    cp = pltpu.make_async_copy(
        x_hbm.at[:, pl.ds(index * d, d)],
        out_hbm,
        sem,
    )
    cp.start()
    cp.wait()


def select_element(x, index):
    """Pallas equivalent of SelectElement(index).forward(x) == x[:, index, ...]."""
    assert x.ndim >= 3, "SelectElement requires x.ndim >= 3"
    assert 0 <= index < x.shape[1], "static index out of range for axis 1"

    B, S = x.shape[0], x.shape[1]
    rest = x.shape[2:]
    D = 1
    for r in rest:
        D *= r

    # Metadata-only view: the selected token is the contiguous window
    # [index*D, (index+1)*D) of each row of x viewed as (B, S*D).
    x2 = x.reshape(B, S * D)

    out2 = pl.pallas_call(
        functools.partial(_select_dma_kernel, index=index, d=D),
        out_shape=jax.ShapeDtypeStruct((B, D), x.dtype),
        # Leave both operands in HBM; the kernel body drives the DMA itself.
        in_specs=[pl.BlockSpec(memory_space=pl.ANY)],
        out_specs=pl.BlockSpec(memory_space=pl.ANY),
        scratch_shapes=[pltpu.SemaphoreType.DMA],
    )(x2)

    return out2.reshape((B,) + rest)


if __name__ == "__main__":
    key = jax.random.PRNGKey(0)

    # Case 1: ndim > 3 (exercises trailing-dim flattening), D = 4*32 = 128.
    B, S, H, W = 16, 8, 4, 32
    INDEX = 3                                   # SelectElement(index=3)
    x = jax.random.normal(key, (B, S, H, W), dtype=jnp.float32)

    out = select_element(x, INDEX)
    out = jax.block_until_ready(out)
    ref = x[:, INDEX, ...]
    assert out.shape == (B, H, W)
    assert bool(jnp.array_equal(out, ref)), "mismatch vs reference x[:, index, ...]"

    # Case 2: plain ndim == 3 (the common CLS-token use in ImageBind).
    B2, S2, D2 = 8, 10, 96                      # D2 not a multiple of 128 on purpose
    INDEX2 = 0
    x2 = jax.random.normal(jax.random.PRNGKey(1), (B2, S2, D2), dtype=jnp.float32)

    out2 = select_element(x2, INDEX2)
    out2 = jax.block_until_ready(out2)
    ref2 = x2[:, INDEX2, ...]
    assert out2.shape == (B2, D2)
    assert bool(jnp.array_equal(out2, ref2)), "mismatch vs reference (ndim==3 case)"

    print("KERNEL_OK")
</pallas_src>

<mosaic_0001>
module attributes {stable_mosaic.version = 11 : i64} {
  func.func @_select_dma_kernel(%arg0: memref<16x1024xf32, #tpu.memory_space<any>>, %arg1: memref<16x128xf32, #tpu.memory_space<any>>, %arg2: memref<!tpu.dma_semaphore, #tpu.memory_space<semaphore_mem>>) attributes {dimension_semantics = [], scalar_prefetch = 0 : i64, scratch_operands = 1 : i64, tpu.core_type = #tpu.core_type<tc>} {
    %c0_i32 = arith.constant 0 : i32
    %c384_i32 = arith.constant 384 : i32
    %0 = tpu.memref_slice %arg0[%c0_i32, %c384_i32] : memref<16x1024xf32, #tpu.memory_space<any>> -> memref<16x128xf32, #tpu.memory_space<any>>
    tpu.enqueue_dma source(%0 : memref<16x128xf32, #tpu.memory_space<any>>) target(%arg1 : memref<16x128xf32, #tpu.memory_space<any>>) target_semaphore(%arg2 : memref<!tpu.dma_semaphore, #tpu.memory_space<semaphore_mem>>)
    %c0_i32_0 = arith.constant 0 : i32
    %c384_i32_1 = arith.constant 384 : i32
    %1 = tpu.memref_slice %arg0[%c0_i32_0, %c384_i32_1] : memref<16x1024xf32, #tpu.memory_space<any>> -> memref<16x128xf32, #tpu.memory_space<any>>
    tpu.wait_dma2 semaphore(%arg2 : memref<!tpu.dma_semaphore, #tpu.memory_space<semaphore_mem>>) src(%1 : memref<16x128xf32, #tpu.memory_space<any>>) dst(%arg1 : memref<16x128xf32, #tpu.memory_space<any>>)
    return
  }
}

</mosaic_0001>

<llo_original>
// kernel: tpu_custom_call.1
$region0: #{tpu_custom_call.1}
  #allocation0 [shape = 'u32[]', space=smem, size = 0x4, offset = 0x4, fixed_abs, tag = 'smem constant byte address 0x4 - core index']
  #allocation1 [shape = 'u32[144,128]{1,0:T(1,128)}', space=vmem, size = 0x12000, scoped, tag = 'internal scratch']
  #allocation2 [shape = 's32[1]{0}', space=sflag, size = 0x4, scoped, tag = 'scratch operand']
  #allocation3 [shape = 's32[]', space=sflag, size = 0x4, offset = 0, fixed_abs, tag = 'sflag constant byte address 0x0 - dummy sync flag']
  %s0 = inlined_call_operand.hbm [shape: f32[16,1024], index: 0, kind: input, shape index: {}]
  %s1 = inlined_call_operand.hbm [shape: f32[16,128], index: 1, kind: output, shape index: {}]
  %s2 = sld [smem:[#allocation0]]
  $region2: #{tpu_custom_call.1} parent=0
    _
  %s4 = ssub.s32 1, %s2
  %s5 = scalar_select 0, %s4, %s2
  $region1: #{tpu_custom_call.1} parent=0
    #allocation4 [shape = 'u32[3]{0}', space=smem, size = 0xc, scoped, tag = 'DMA stride descriptor']
    %s6 = scalar_lea.hbm %s0, 384
    %s8 = sshll.u32 1, 14
    %s9 = sxor.u32 4294967295, %s8
    %s12 = sshll.u32 3, 24
    %s13 = sxor.u32 4294967295, %s12
    %s14 = sand.u32 0, %s13
    %s16 = sor.u32 %s14, 0
    %19 = sst [smem:[#allocation4]] 1024
    %s20 = scalar_lea.smem [#allocation4], 1
    %21 = sst [smem:[%s20]] 128
    %s22 = scalar_lea.smem [#allocation4], 2
    %23 = sst [smem:[%s22]] 8
    %25 = dma.general %s6, 256, %s1, [#allocation2], [#allocation3], [#allocation4], %s16, 0
    %s26 = smul.u32 8, 2
    %s27 = smul.u32 %s26, 1
    %s28 = sshll.u32 %s27, 4
    %29 = dma.done [#allocation2], %s28
  %30 = vsyncmov [#allocation2]
  %s31 = vpop.sfrf %30
  %p32 = scmp.eq.s32.totalorder %s31, 0
  %p33 = pneg %p32
  %35 = shalt.err (%p33)

</llo_original>
